<compile_context>
chip_gen: v7x
topology: tpu7x:2x2x1
jax: 0.10.0
libtpu: 0.0.40
codegen_flags: <defaults>
</compile_context>

<pallas_src>
import functools

import jax
import jax.numpy as jnp
from jax.experimental import pallas as pl
from jax.experimental.pallas import tpu as pltpu

_MIB = 1024 * 1024


def _triplet_loss_kernel(a_ref, p_ref, g_ref, o_ref, *, margin, eps, eps_sq_corr):
    a = a_ref[...].astype(jnp.float32)
    p = p_ref[...].astype(jnp.float32)
    g = g_ref[...].astype(jnp.float32)

    dp = jnp.abs(a - p) + eps
    dn = jnp.abs(a - g) + eps
    d_p = jnp.sum(dp * dp, axis=1, keepdims=True)   # (TB, 1)
    d_n = jnp.sum(dn * dn, axis=1, keepdims=True)   # (TB, 1)

    # Zero-padded feature lanes each contribute exactly eps^2; correct with a
    # static constant instead of a per-element mask (exact, much cheaper).
    if eps_sq_corr != 0.0:
        d_p = d_p - eps_sq_corr
        d_n = d_n - eps_sq_corr

    # hinge = clamp(log(d_p+1) + margin - log(d_n+1), min=0)
    hinge = jnp.maximum(jnp.log1p(d_p) - jnp.log1p(d_n) + margin, 0.0)

    # Per-tile partial sum; lane-dense (8,128) output block, wrapper reduces.
    tile_sum = jnp.sum(hinge)
    o_ref[...] = jnp.broadcast_to(tile_sum, o_ref.shape).astype(o_ref.dtype)


def _vmem_budgets():
    """(live_tile_budget_bytes, base_vmem_limit_bytes, vmem_limit_cap_bytes)."""
    kind = ""
    try:
        kind = jax.devices()[0].device_kind.lower()
    except Exception:  # pragma: no cover - conservative fallback
        pass
    if "v7" in kind:
        # Only 64 MiB physical VMEM per TensorCore: stay well under it.
        return 20 * _MIB, 48 * _MIB, 56 * _MIB
    if "v6" in kind or "v5p" in kind:
        # 128 MiB physical VMEM, 32 MiB scoped default.
        return 32 * _MIB, 80 * _MIB, 100 * _MIB
    if "v5" in kind:
        # v5e: mem-bound at ~0.82 TB/s; 12 MiB live is plenty, but the 32 MiB
        # vmem_limit override is required (16 MiB scoped default).
        return 12 * _MIB, 32 * _MIB, 100 * _MIB
    # Unknown generation: conservative.
    return 12 * _MIB, 32 * _MIB, 48 * _MIB


def triplet_loss(anchor, positive, generate, *, margin, eps=1e-6, tile_b=None):
    assert anchor.shape == positive.shape == generate.shape
    assert anchor.ndim == 2
    B, D = anchor.shape

    # Lane-dense feature axis: pad D up to a multiple of 128 (no-op if aligned).
    D_pad = ((D + 127) // 128) * 128
    itemsize = jnp.dtype(anchor.dtype).itemsize
    # Sub-32-bit dtypes pack rows along sublanes: round TB to 8/16/32 rows.
    sub = max(8, 32 // itemsize)

    budget, base_limit, limit_cap = _vmem_budgets()

    if tile_b is None:
        # 3 inputs x 2 pipeline buffers x TB x D_pad within the live budget.
        tb = budget // (3 * 2 * D_pad * itemsize)
        TB = max(sub, (tb // sub) * sub)
    else:
        TB = max(sub, ((int(tile_b) + sub - 1) // sub) * sub)
    b_ceil = ((B + sub - 1) // sub) * sub
    TB = min(TB, b_ceil)

    num_tiles = pl.cdiv(B, TB)
    B_pad = num_tiles * TB
    pad_rows = B_pad - B

    # Re-check: the sublane floor (or an explicit tile_b) can exceed the budget
    # for very wide D; raise the vmem limit to fit, capped per generation.
    live_bytes = 3 * 2 * TB * D_pad * itemsize
    vmem_limit = int(min(limit_cap, max(base_limit, live_bytes + 8 * _MIB)))

    if B_pad != B or D_pad != D:
        def _pad(x):
            return jnp.pad(x, ((0, B_pad - B), (0, D_pad - D)))
        a, p, g = _pad(anchor), _pad(positive), _pad(generate)
    else:
        a, p, g = anchor, positive, generate

    eps_sq_corr = float((D_pad - D) * eps * eps)

    kernel = functools.partial(
        _triplet_loss_kernel,
        margin=float(margin), eps=float(eps), eps_sq_corr=eps_sq_corr,
    )

    in_spec = pl.BlockSpec((TB, D_pad), lambda i: (i, 0))
    partials = pl.pallas_call(
        kernel,
        out_shape=jax.ShapeDtypeStruct((num_tiles, 8, 128), jnp.float32),
        grid_spec=pltpu.PrefetchScalarGridSpec(
            num_scalar_prefetch=0,
            grid=(num_tiles,),
            in_specs=[in_spec, in_spec, in_spec],
            out_specs=pl.BlockSpec((1, 8, 128), lambda i: (i, 0, 0)),
        ),
        compiler_params=pltpu.CompilerParams(
            dimension_semantics=("parallel",),
            vmem_limit_bytes=vmem_limit,
        ),
    )(a, p, g)

    total = jnp.sum(partials[:, 0, 0])
    if pad_rows:
        # Padded rows are all-zero in a/p/g, so d_p == d_n bitwise and their
        # hinge is exactly max(margin, 0); remove that known constant.
        total = total - pad_rows * max(float(margin), 0.0)
    return total / B


def _reference(anchor, positive, generate, margin, eps=1e-6):
    a = anchor.astype(jnp.float32)
    p = positive.astype(jnp.float32)
    g = generate.astype(jnp.float32)
    d_p = jnp.sum((jnp.abs(a - p) + eps) ** 2, axis=1, keepdims=True)
    d_n = jnp.sum((jnp.abs(a - g) + eps) ** 2, axis=1, keepdims=True)
    hinge = jnp.maximum(jnp.log(d_p + 1.0) + margin - jnp.log(d_n + 1.0), 0.0)
    return jnp.mean(hinge)


if __name__ == "__main__":
    key = jax.random.PRNGKey(0)
    k1, k2, k3, k4, k5, k6 = jax.random.split(key, 6)
    margin = 1.0

    # Case 1: small shapes from the module spec (single tile, D padded 32 -> 128).
    B, D = 8, 32
    anchor = jax.random.normal(k1, (B, D), dtype=jnp.float32)
    positive = jax.random.normal(k2, (B, D), dtype=jnp.float32)
    generate = jax.random.normal(k3, (B, D), dtype=jnp.float32)
    loss1 = triplet_loss(anchor, positive, generate, margin=margin)
    jax.block_until_ready(loss1)
    ref1 = _reference(anchor, positive, generate, margin)
    assert jnp.allclose(loss1, ref1, atol=1e-5, rtol=1e-5), (loss1, ref1)

    # Case 2: multi-tile grid, ragged batch + non-aligned D (exercises the
    # eps^2 lane correction and the wrapper-side pad-row correction).
    B2, D2 = 300, 160
    a2 = jax.random.normal(k4, (B2, D2), dtype=jnp.float32)
    p2 = jax.random.normal(k5, (B2, D2), dtype=jnp.float32)
    g2 = jax.random.normal(k6, (B2, D2), dtype=jnp.float32)
    loss2 = triplet_loss(a2, p2, g2, margin=margin, tile_b=128)
    jax.block_until_ready(loss2)
    ref2 = _reference(a2, p2, g2, margin)
    assert jnp.allclose(loss2, ref2, atol=1e-5, rtol=1e-5), (loss2, ref2)

    print("KERNEL_OK")
</pallas_src>

<mosaic_0001>
module attributes {stable_mosaic.version = 11 : i64} {
  func.func @_triplet_loss_kernel(%arg0: i32, %arg1: memref<8x128xf32, #tpu.memory_space<vmem>>, %arg2: memref<8x128xf32, #tpu.memory_space<vmem>>, %arg3: memref<8x128xf32, #tpu.memory_space<vmem>>, %arg4: memref<1x8x128xf32, #tpu.memory_space<vmem>>) attributes {dimension_semantics = [#tpu.dimension_semantics<parallel>], iteration_bounds = array<i64: 1>, scalar_prefetch = 0 : i64, scratch_operands = 0 : i64, tpu.core_type = #tpu.core_type<tc>, window_params = [{transform_indices = @transform_0, window_bounds = array<i64: 8, 128>}, {transform_indices = @transform_1, window_bounds = array<i64: 8, 128>}, {transform_indices = @transform_2, window_bounds = array<i64: 8, 128>}, {transform_indices = @transform_3, window_bounds = array<i64: 1, 8, 128>}]} {
    %c0 = arith.constant 0 : index
    %c0_0 = arith.constant 0 : index
    %0 = vector.load %arg1[%c0, %c0_0] : memref<8x128xf32, #tpu.memory_space<vmem>>, vector<8x128xf32>
    %c0_1 = arith.constant 0 : index
    %c0_2 = arith.constant 0 : index
    %1 = vector.load %arg2[%c0_1, %c0_2] : memref<8x128xf32, #tpu.memory_space<vmem>>, vector<8x128xf32>
    %c0_3 = arith.constant 0 : index
    %c0_4 = arith.constant 0 : index
    %2 = vector.load %arg3[%c0_3, %c0_4] : memref<8x128xf32, #tpu.memory_space<vmem>>, vector<8x128xf32>
    %3 = arith.subf %0, %1 : vector<8x128xf32>
    %4 = math.absf %3 : vector<8x128xf32>
    %cst = arith.constant 9.99999997E-7 : f32
    %5 = vector.broadcast %cst : f32 to vector<8x128xf32>
    %6 = arith.addf %4, %5 : vector<8x128xf32>
    %7 = arith.subf %0, %2 : vector<8x128xf32>
    %8 = math.absf %7 : vector<8x128xf32>
    %cst_5 = arith.constant 9.99999997E-7 : f32
    %9 = vector.broadcast %cst_5 : f32 to vector<8x128xf32>
    %10 = arith.addf %8, %9 : vector<8x128xf32>
    %11 = arith.mulf %6, %6 : vector<8x128xf32>
    %cst_6 = arith.constant dense<0.000000e+00> : vector<8xf32>
    %12 = vector.multi_reduction <add>, %11, %cst_6 [1] : vector<8x128xf32> to vector<8xf32>
    %13 = vector.shape_cast %12 : vector<8xf32> to vector<8x1xf32>
    %14 = arith.mulf %10, %10 : vector<8x128xf32>
    %cst_7 = arith.constant dense<0.000000e+00> : vector<8xf32>
    %15 = vector.multi_reduction <add>, %14, %cst_7 [1] : vector<8x128xf32> to vector<8xf32>
    %16 = vector.shape_cast %15 : vector<8xf32> to vector<8x1xf32>
    %cst_8 = arith.constant 9.59999996E-11 : f32
    %17 = vector.broadcast %cst_8 : f32 to vector<8x1xf32>
    %18 = arith.subf %13, %17 : vector<8x1xf32>
    %cst_9 = arith.constant 9.59999996E-11 : f32
    %19 = vector.broadcast %cst_9 : f32 to vector<8x1xf32>
    %20 = arith.subf %16, %19 : vector<8x1xf32>
    %21 = math.log1p %18 : vector<8x1xf32>
    %22 = math.log1p %20 : vector<8x1xf32>
    %23 = arith.subf %21, %22 : vector<8x1xf32>
    %cst_10 = arith.constant 1.000000e+00 : f32
    %24 = vector.broadcast %cst_10 : f32 to vector<8x1xf32>
    %25 = arith.addf %23, %24 : vector<8x1xf32>
    %cst_11 = arith.constant 0.000000e+00 : f32
    %26 = vector.broadcast %cst_11 : f32 to vector<8x1xf32>
    %27 = arith.maximumf %25, %26 : vector<8x1xf32>
    %28 = vector.shape_cast %27 : vector<8x1xf32> to vector<1x8x1xf32>
    %cst_12 = arith.constant dense<0.000000e+00> : vector<1xf32>
    %29 = vector.multi_reduction <add>, %28, %cst_12 [1, 2] : vector<1x8x1xf32> to vector<1xf32>
    %30 = vector.shape_cast %29 : vector<1xf32> to vector<1x1x1xf32>
    %31 = vector.extract %30[0, 0, 0] : f32 from vector<1x1x1xf32>
    %32 = vector.broadcast %31 : f32 to vector<1x8x128xf32>
    %c0_13 = arith.constant 0 : index
    %c0_14 = arith.constant 0 : index
    %c0_15 = arith.constant 0 : index
    %33 = vector.load %arg4[%c0_13, %c0_14, %c0_15] : memref<1x8x128xf32, #tpu.memory_space<vmem>>, vector<1x8x128xf32>
    tpu.vector_store %arg4[%c0_13, %c0_14, %c0_15], %32 {strides = array<i32>} : memref<1x8x128xf32, #tpu.memory_space<vmem>>, vector<1x8x128xf32>,
    return
  }
  func.func @transform_0(%arg0: i32) -> (i32, i32) {
    %c0_i32 = arith.constant 0 : i32
    %c0_i32_0 = arith.constant 0 : i32
    return %arg0, %c0_i32 : i32, i32
  }
  func.func @transform_1(%arg0: i32) -> (i32, i32) {
    %c0_i32 = arith.constant 0 : i32
    %c0_i32_0 = arith.constant 0 : i32
    return %arg0, %c0_i32 : i32, i32
  }
  func.func @transform_2(%arg0: i32) -> (i32, i32) {
    %c0_i32 = arith.constant 0 : i32
    %c0_i32_0 = arith.constant 0 : i32
    return %arg0, %c0_i32 : i32, i32
  }
  func.func @transform_3(%arg0: i32) -> (i32, i32, i32) {
    %c0_i32 = arith.constant 0 : i32
    %c0_i32_0 = arith.constant 0 : i32
    %c0_i32_1 = arith.constant 0 : i32
    return %arg0, %c0_i32, %c0_i32_0 : i32, i32, i32
  }
}

</mosaic_0001>

<llo_original>
// kernel: tpu_custom_call.1
$region0: #{tpu_custom_call.1}
  #allocation0 [shape = 'u32[]', space=smem, size = 0x4, offset = 0x4, fixed_abs, tag = 'smem constant byte address 0x4 - core index']
  #allocation1 [shape = 'u32[144,128]{1,0:T(1,128)}', space=vmem, size = 0x12000, scoped, tag = 'internal scratch']
  %s0 = inlined_call_operand.hbm [shape: f32[8,128], index: 0, kind: input, shape index: {}]
  %s1 = inlined_call_operand.hbm [shape: f32[8,128], index: 1, kind: input, shape index: {}]
  %s2 = inlined_call_operand.hbm [shape: f32[8,128], index: 2, kind: input, shape index: {}]
  %s3 = inlined_call_operand.hbm [shape: f32[1,8,128], index: 3, kind: output, shape index: {}]
  %s4 = sld [smem:[#allocation0]]
  $region34: #{tpu_custom_call.1} parent=0
    _
  %s6 = ssub.s32 1, %s4
  %s7 = scalar_select 0, %s6, %s4
  $region1: #{tpu_custom_call.1} parent=0
    #allocation2 [shape = 'u8[4096]{0}', space=vmem, size = 0x1000, scoped, tag = 'input window, operand 0, single buffered']
    #allocation3 [shape = 's32[1]{0}', space=sflag, size = 0x4, scoped, tag = 'scoped memory for tpu_custom_call.1']
    #allocation4 [shape = 's32[1]{0}', space=sflag, size = 0x4, scoped, tag = 'scoped memory for tpu_custom_call.1']
    #allocation5 [shape = 'u8[4096]{0}', space=vmem, size = 0x1000, scoped, tag = 'input window, operand 1, single buffered']
    #allocation6 [shape = 's32[1]{0}', space=sflag, size = 0x4, scoped, tag = 'scoped memory for tpu_custom_call.1']
    #allocation7 [shape = 'u8[4096]{0}', space=vmem, size = 0x1000, scoped, tag = 'input window, operand 2, single buffered']
    #allocation8 [shape = 'u8[4096]{0}', space=vmem, size = 0x1000, scoped, tag = 'output window, operand 0, single buffered']
    %8 = vsyncpa [#allocation3], 0
    %9 = vsyncpa [#allocation6], 0
    %10 = vsyncpa [#allocation4], 0
    // Predicated region
    $region2: #{tpu_custom_call.1} parent=1 // pred_check
      _
    $region3: #{tpu_custom_call.1} parent=1 // pred_check_branch
      %12 = sbr.rel (0) target = $region5
    $region4: #{tpu_custom_call.1} parent=1 // pred_region
      %s14 = ssub.s32 128, 128
      %15 = vsyncadd [#allocation3], %s14
      %s17 = sshll.u32 [#allocation2], 4
      %s18 = int_to_ptr.vmem [resolvable:$true] %s17
      %20 = dma.hbm_to_vmem [thread:$0]  %s0, 128, %s18, [#allocation3]
    $region5: #{tpu_custom_call.1} parent=1 // pred_fallthru
      _
    // Predicated region
    $region6: #{tpu_custom_call.1} parent=1 // pred_check
      _
    $region7: #{tpu_custom_call.1} parent=1 // pred_check_branch
      %22 = sbr.rel (0) target = $region9
    $region8: #{tpu_custom_call.1} parent=1 // pred_region
      %s24 = ssub.s32 128, 128
      %25 = vsyncadd [#allocation6], %s24
      %s27 = sshll.u32 [#allocation5], 4
      %s28 = int_to_ptr.vmem [resolvable:$true] %s27
      %30 = dma.hbm_to_vmem [thread:$0]  %s1, 128, %s28, [#allocation6]
    $region9: #{tpu_custom_call.1} parent=1 // pred_fallthru
      _
    // Predicated region
    $region10: #{tpu_custom_call.1} parent=1 // pred_check
      _
    $region11: #{tpu_custom_call.1} parent=1 // pred_check_branch
      %32 = sbr.rel (0) target = $region13
    $region12: #{tpu_custom_call.1} parent=1 // pred_region
      %s34 = ssub.s32 128, 128
      %35 = vsyncadd [#allocation6], %s34
      %s37 = sshll.u32 [#allocation7], 4
      %s38 = int_to_ptr.vmem [resolvable:$true] %s37
      %40 = dma.hbm_to_vmem [thread:$0]  %s2, 128, %s38, [#allocation6]
    $region13: #{tpu_custom_call.1} parent=1 // pred_fallthru
      _
    // Predicated region
    $region14: #{tpu_custom_call.1} parent=1 // pred_check
      _
    $region15: #{tpu_custom_call.1} parent=1 // pred_check_branch
      %42 = sbr.rel (0) target = $region17
    $region16: #{tpu_custom_call.1} parent=1 // pred_region
      %43 = dma.done [#allocation3], 128
    $region17: #{tpu_custom_call.1} parent=1 // pred_fallthru
      _
    // Predicated region
    $region18: #{tpu_custom_call.1} parent=1 // pred_check
      _
    $region19: #{tpu_custom_call.1} parent=1 // pred_check_branch
      %45 = sbr.rel (0) target = $region21
    $region20: #{tpu_custom_call.1} parent=1 // pred_region
      %46 = dma.done [#allocation6], 128
    $region21: #{tpu_custom_call.1} parent=1 // pred_fallthru
      _
    // Predicated region
    $region22: #{tpu_custom_call.1} parent=1 // pred_check
      _
    $region23: #{tpu_custom_call.1} parent=1 // pred_check_branch
      %48 = sbr.rel (0) target = $region25
    $region24: #{tpu_custom_call.1} parent=1 // pred_region
      %49 = dma.done [#allocation6], 128
    $region25: #{tpu_custom_call.1} parent=1 // pred_fallthru
      _
    %v50 = vld [vmem:[#allocation2] sm:$0xff]
    %v51 = vld [vmem:[#allocation5] sm:$0xff]
    %v52 = vld [vmem:[#allocation7] sm:$0xff]
    %v53 = vsub.f32 %v50, %v51
    %v54 = vand.u32 2147483647, %v53
    %v55 = vadd.f32 %v54, 1e-06
    %v56 = vsub.f32 %v50, %v52
    %v57 = vand.u32 2147483647, %v56
    %v58 = vadd.f32 %v57, 1e-06
    %v59 = vmul.f32 %v55, %v55
    %60 = vadd.xlane.f32.xlu0 %v59
    %v61 = vpop.xlane.xlu0 %60
    %v62 = vmul.f32 %v58, %v58
    %63 = vadd.xlane.f32.xlu0 %v62
    %v64 = vpop.xlane.xlu0 %63
    %v65 = vsub.f32 %v61, 9.6e-11
    %v66 = vsub.f32 %v64, 9.6e-11
    %v67 = vadd.f32 %v65, 1.0
    %v68 = vlog2.pop %v67
    %v69 = vmul.f32 %v68, 0.6931472
    %v70 = vmul.f32 -0.5, %v65
    %v71 = vadd.f32 %v70, 1.0
    %v72 = vmul.f32 %v71, %v65
    %v73 = vand.u32 2147483647, %v65
    %vm74 = vcmp.lt.f32.partialorder %v73, 0.0004427343
    %v75 = vsel %vm74, %v72, %v69
    %v76 = vadd.f32 %v66, 1.0
    %v77 = vlog2.pop %v76
    %v78 = vmul.f32 %v77, 0.6931472
    %v79 = vmul.f32 -0.5, %v66
    %v80 = vadd.f32 %v79, 1.0
    %v81 = vmul.f32 %v80, %v66
    %v82 = vand.u32 2147483647, %v66
    %vm83 = vcmp.lt.f32.partialorder %v82, 0.0004427343
    %v84 = vsel %vm83, %v81, %v78
    %v85 = vsub.f32 %v75, %v84
    %v86 = vadd.f32 %v85, 1.0
    %v87 = vmax.f32 %v86, 0.0
    %vm88 = vcmask 7168
    %v89 = vsel %vm88, %v87, 0.0
    %90 = vadd.xlane.f32.xlu0 %v89
    %v91 = vpop.xlane.xlu0 %90
    %v92 = vrot.slane %v91, 4
    %v93 = vadd.f32 %v91, %v92
    %v94 = vrot.slane %v93, 2
    %v95 = vadd.f32 %v93, %v94
    %v96 = vrot.slane %v95, 1
    %v97 = vadd.f32 %v95, %v96
    %s98 = vtos %v97
    %v99 = vstv %s98
    %100 = vst [vmem:[#allocation8] sm:$0xff] %v99
    // Predicated region
    $region26: #{tpu_custom_call.1} parent=1 // pred_check
      _
    $region27: #{tpu_custom_call.1} parent=1 // pred_check_branch
      %102 = sbr.rel (0) target = $region29
    $region28: #{tpu_custom_call.1} parent=1 // pred_region
      %s104 = ssub.s32 128, 128
      %105 = vsyncadd [#allocation4], %s104
      %s107 = sshll.u32 [#allocation8], 4
      %s108 = int_to_ptr.vmem [resolvable:$true] %s107
      %110 = dma.vmem_to_hbm [thread:$0]  %s108, 128, %s3, [#allocation4]
    $region29: #{tpu_custom_call.1} parent=1 // pred_fallthru
      _
    // Predicated region
    $region30: #{tpu_custom_call.1} parent=1 // pred_check
      _
    $region31: #{tpu_custom_call.1} parent=1 // pred_check_branch
      %112 = sbr.rel (0) target = $region33
    $region32: #{tpu_custom_call.1} parent=1 // pred_region
      %113 = dma.done [#allocation4], 128
    $region33: #{tpu_custom_call.1} parent=1 // pred_fallthru
      _
    %114 = vsyncpa [#allocation3], 1
    %115 = vsyncpa [#allocation6], 1
    %116 = vsyncpa [#allocation4], 1

</llo_original>
